<compile_context>
chip_gen: v5e
topology: v5e:2x2
jax: 0.10.0
libtpu: 0.0.40
codegen_flags: <defaults>
</compile_context>

<pallas_src>
import math

import jax
import jax.numpy as jnp
from jax.experimental import pallas as pl
from jax.experimental.pallas import tpu as pltpu


TARGET_TILE_BYTES = 4 * 1024 * 1024      # per-tile target (amortize grid-step overhead)
MIN_TILE_BYTES = 128 * 1024              # floor when shrinking tiles for pipeline overlap
SMALL_BYPASS_BYTES = 256 * 1024          # below this, pallas launch overhead dominates
VMEM_LIMIT_BYTES = 32 * 1024 * 1024      # 2 bufs x (in + out) x 4 MiB = 16 MiB resident << 32 MiB


def _scale_kernel(s_ref, x_ref, o_ref):
    # s_ref: (1,) f32 scale in SMEM; x_ref / o_ref: (tile_rows, lane) VMEM tiles.
    # bf16 input is promoted to f32 by the multiply and cast back on store.
    o_ref[...] = (x_ref[...] * s_ref[0]).astype(o_ref.dtype)


def _choose_tile_rows(rows: int, lane: int, itemsize: int) -> int:
    bytes_per_row = lane * itemsize
    tile_rows = max(8, (TARGET_TILE_BYTES // bytes_per_row) // 8 * 8)
    # Guarantee >= 4 pipeline steps for DMA/compute overlap on mid-sized tensors.
    if -(-rows // tile_rows) < 4:
        min_rows = max(8, (MIN_TILE_BYTES // bytes_per_row) // 8 * 8)
        cand = -(-rows // 4)            # ceil(rows / 4)
        cand = -(-cand // 8) * 8        # round up to a multiple of 8
        tile_rows = max(min_rows, min(tile_rows, cand))
    return tile_rows


def scale_forward(x: jax.Array, scale: jax.Array) -> jax.Array:
    """Forward of `Scale`: x * scale, for x of any shape, scale scalar/(1,)."""
    scale = jnp.asarray(scale, jnp.float32).reshape(1)   # robust to 0-d params
    orig_shape = x.shape
    dtype = x.dtype
    total = math.prod(orig_shape) if orig_shape else 1
    itemsize = jnp.dtype(dtype).itemsize

    if total == 0:
        return x

    # Small tensors and non-128-multiple totals: a fused XLA multiply is already
    # at the HBM roofline and avoids all reshape/pad plumbing + launch overhead.
    if total * itemsize < SMALL_BYPASS_BYTES or total % 128 != 0:
        return (x * scale[0]).astype(dtype)

    # --- lane-dense layout: last dim a multiple of 128 (prefer 1024) --------
    lane = 128
    for cand in (1024, 512, 256, 128):
        if total % cand == 0:
            lane = cand
            break
    rows = total // lane
    x2d = x.reshape(rows, lane)                 # contiguous reshape: metadata only

    tile_rows = _choose_tile_rows(rows, lane, itemsize)
    grid = (pl.cdiv(rows, tile_rows),)          # ragged last block masked by Pallas

    out = pl.pallas_call(
        _scale_kernel,
        out_shape=jax.ShapeDtypeStruct((rows, lane), dtype),
        grid_spec=pl.GridSpec(
            grid=grid,
            in_specs=[
                pl.BlockSpec(memory_space=pltpu.MemorySpace.SMEM),     # scale (1,)
                pl.BlockSpec((tile_rows, lane), lambda i: (i, 0)),     # x tile
            ],
            out_specs=pl.BlockSpec((tile_rows, lane), lambda i: (i, 0)),
        ),
        compiler_params=pltpu.CompilerParams(
            # Rows are independent -> parallel; lets v7x shard the grid across
            # both TensorCores (each with its own HBM path).
            dimension_semantics=("parallel",),
            vmem_limit_bytes=VMEM_LIMIT_BYTES,
        ),
    )(scale, x2d)

    return out.reshape(orig_shape)


if __name__ == "__main__":
    key = jax.random.PRNGKey(0)
    k1, k2, k3 = jax.random.split(key, 3)

    # --- primary check: small NCHW feature map (matches module usage) -------
    # 2*4*16*16*4B = 8 KiB -> fast XLA bypass path.
    x = jax.random.normal(key, (2, 4, 16, 16), dtype=jnp.float32)
    scale_one = jnp.array([1.0], dtype=jnp.float32)      # Scale(scale=1.0)
    scale_half = jnp.array(0.5, dtype=jnp.float32)       # 0-d param, like torch

    y = jax.block_until_ready(scale_forward(x, scale_one))
    assert y.shape == x.shape and y.dtype == x.dtype
    assert jnp.allclose(y, x, atol=1e-6, rtol=1e-6)

    y2 = jax.block_until_ready(scale_forward(x, scale_half))
    assert jnp.allclose(y2, x * 0.5, atol=1e-6, rtol=1e-6)

    # --- Pallas path: 4 MiB tensor, grid >= 4, pipelined, no padding --------
    x_big = jax.random.normal(k1, (4, 16, 128, 128), dtype=jnp.float32)   # 1M elems
    y_big = jax.block_until_ready(scale_forward(x_big, scale_half))
    assert y_big.shape == x_big.shape and y_big.dtype == x_big.dtype
    assert jnp.allclose(y_big, x_big * 0.5, atol=1e-6, rtol=1e-6)

    # --- Pallas path with ragged last block (rows % tile_rows != 0) ---------
    x_rag = jax.random.normal(k2, (3, 5, 128, 128), dtype=jnp.float32)    # 960 KiB
    y_rag = jax.block_until_ready(scale_forward(x_rag, scale_half))
    assert jnp.allclose(y_rag, x_rag * 0.5, atol=1e-6, rtol=1e-6)

    # --- odd-size path: total not a multiple of 128 -> XLA fallback ---------
    x_odd = jax.random.normal(k3, (2, 3, 7, 5), dtype=jnp.float32)        # 210 elems
    y_odd = jax.block_until_ready(scale_forward(x_odd, scale_half))
    assert jnp.allclose(y_odd, x_odd * 0.5, atol=1e-6, rtol=1e-6)

    # --- dtype path: bf16 input, f32 scale param (Pallas path) --------------
    x_bf16 = x_big.astype(jnp.bfloat16)
    y_bf16 = jax.block_until_ready(scale_forward(x_bf16, scale_half))
    assert y_bf16.dtype == jnp.bfloat16
    assert jnp.allclose(y_bf16.astype(jnp.float32),
                        x_bf16.astype(jnp.float32) * 0.5, atol=1e-2, rtol=1e-2)

    print("KERNEL_OK")
</pallas_src>

<mosaic_0001>
module attributes {stable_mosaic.version = 11 : i64} {
  func.func @_scale_kernel(%arg0: i32, %arg1: memref<1xf32, #tpu.memory_space<smem>>, %arg2: memref<256x1024xf32, #tpu.memory_space<vmem>>, %arg3: memref<256x1024xf32, #tpu.memory_space<vmem>>) attributes {dimension_semantics = [#tpu.dimension_semantics<parallel>], iteration_bounds = array<i64: 4>, scalar_prefetch = 0 : i64, scratch_operands = 0 : i64, tpu.core_type = #tpu.core_type<tc>, window_params = [{transform_indices = @transform_0, window_bounds = array<i64: 1>}, {transform_indices = @transform_1, window_bounds = array<i64: 256, 1024>}, {transform_indices = @transform_2, window_bounds = array<i64: 256, 1024>}]} {
    %c0 = arith.constant 0 : index
    %c0_0 = arith.constant 0 : index
    %0 = vector.load %arg2[%c0, %c0_0] : memref<256x1024xf32, #tpu.memory_space<vmem>>, vector<256x1024xf32>
    %c0_1 = arith.constant 0 : index
    %1 = memref.load %arg1[%c0_1] : memref<1xf32, #tpu.memory_space<smem>>
    %2 = vector.broadcast %1 : f32 to vector<256x1024xf32>
    %3 = arith.mulf %0, %2 : vector<256x1024xf32>
    %c0_2 = arith.constant 0 : index
    %c0_3 = arith.constant 0 : index
    %4 = vector.load %arg3[%c0_2, %c0_3] : memref<256x1024xf32, #tpu.memory_space<vmem>>, vector<256x1024xf32>
    tpu.vector_store %arg3[%c0_2, %c0_3], %3 {strides = array<i32>} : memref<256x1024xf32, #tpu.memory_space<vmem>>, vector<256x1024xf32>,
    return
  }
  func.func @transform_0(%arg0: i32) -> i32 {
    %c0_i32 = arith.constant 0 : i32
    %c0_i32_0 = arith.constant 0 : i32
    return %c0_i32 : i32
  }
  func.func @transform_1(%arg0: i32) -> (i32, i32) {
    %c0_i32 = arith.constant 0 : i32
    %c0_i32_0 = arith.constant 0 : i32
    return %arg0, %c0_i32 : i32, i32
  }
  func.func @transform_2(%arg0: i32) -> (i32, i32) {
    %c0_i32 = arith.constant 0 : i32
    %c0_i32_0 = arith.constant 0 : i32
    return %arg0, %c0_i32 : i32, i32
  }
}

</mosaic_0001>

<llo_original>
// kernel: tpu_custom_call.1
$region0: #{tpu_custom_call.1}
  #allocation0 [shape = 'u32[]', space=smem, size = 0x4, offset = 0x4, fixed_abs, tag = 'smem constant byte address 0x4 - core index']
  #allocation1 [shape = 'u32[72,128]{1,0:T(1,128)}', space=vmem, size = 0x9000, scoped, tag = 'internal scratch']
  #allocation2 [shape = 'f32[1]{0:T(128)S(6)}', space=smem, size = 0x200, scoped, tag = 'scoped memory for tpu_custom_call.1']
  %s0 = inlined_call_operand.<no memory space> [shape: f32[1], index: 0, kind: input, shape index: {}]
  %s1 = inlined_call_operand.hbm [shape: f32[1024,1024], index: 1, kind: input, shape index: {}]
  %s2 = inlined_call_operand.hbm [shape: f32[1024,1024], index: 2, kind: output, shape index: {}]
  %s3 = sld [smem:[#allocation0]]
  $region45: #{tpu_custom_call.1} parent=0
    _
  %s5 = ssub.s32 1, %s3
  %s6 = scalar_select 0, %s5, %s3
  %7 = sst [smem:[#allocation2]] %s0
  $region1: #{tpu_custom_call.1} parent=0
    #allocation3 [shape = 'u8[2097152]{0}', space=vmem, size = 0x200000, scoped, tag = 'input window, operand 1']
    #allocation4 [shape = 's32[2]{0}', space=sflag, size = 0x8, scoped, tag = 'scoped memory for tpu_custom_call.1']
    #allocation5 [shape = 's32[2]{0}', space=sflag, size = 0x8, scoped, tag = 'scoped memory for tpu_custom_call.1']
    #allocation6 [shape = 'u8[2097152]{0}', space=vmem, size = 0x200000, scoped, tag = 'output window, operand 0']
    %8 = vsyncpa [#allocation4], 0
    %s9 = scalar_lea.sflag [#allocation4], 1
    %10 = vsyncpa %s9, 0
    %11 = vsyncpa [#allocation5], 0
    %s12 = scalar_lea.sflag [#allocation5], 1
    %13 = vsyncpa %s12, 0
    loop: start=0, step=1, limit=6
    $region2: #{tpu_custom_call.1} parent=1 // loop_pre_header
      _
    $region3: #{tpu_custom_call.1} parent=1 // loop_header
      %s15 = sphi 0, %s19
      %p16 = scmp.ge.s32.totalorder %s15, 6
      %s23 = sphi 0, %s23
      %s25 = sphi 0, %s23
      %s26 = sphi 0, %s25
      %s40 = sphi 0, %s26
      %s46 = sphi 0, %s48
      %s49 = sphi 0, %s46
      %s50 = sphi 0, %s49
      %s66 = sphi 0, %s50
      %s72 = sphi 0, %s74
      %s75 = sphi 0, %s72
      %s76 = sphi 0, %s75
      %s92 = sphi 0, %s76
    $region4: #{tpu_custom_call.1} parent=1 // loop_header_branch
      %18 = sbr.rel (%p16) target = $region8
    $region5: #{tpu_custom_call.1} parent=1 // loop_body
      %s20 = ssub.s32 %s15, 1
      %s21 = ssub.s32 %s15, 2
      %s22 = sadd.s32 %s15, 1
      %s24 = sadd.s32 %s23, 1
      %p27 = scmp.eq.s32.totalorder %s15, 3
      %p28 = scmp.ne.s32.totalorder %s23, %s25
      %p29 = scmp.eq.s32.totalorder %s15, 0
      %p30 = por %p28, %p29
      %p31 = scmp.ne.s32.totalorder %s23, %s25
      %p32 = scmp.eq.s32.totalorder %s20, 3
      %p33 = por %p31, %p32
      %p34 = scmp.ne.s32.totalorder %s25, %s26
      %p35 = scmp.eq.s32.totalorder %s20, 0
      %p36 = por %p34, %p35
      %p37 = scmp.ne.s32.totalorder %s25, %s26
      %p38 = scmp.eq.s32.totalorder %s21, 3
      %p39 = por %p37, %p38
      %p41 = scmp.ne.s32.totalorder %s26, %s40
      %p42 = scmp.eq.s32.totalorder %s21, 0
      %p43 = por %p41, %p42
      %s44 = ssub.s32 %s15, %s22
      %p45 = scmp.eq.s32.totalorder %s44, 0
      %s47 = sadd.s32 %s46, 1
      %s48 = scalar_select %p45, %s46, %s47
      %p51 = pneg %p45
      %p52 = scmp.eq.s32.totalorder %s15, 3
      %p53 = por %p51, %p52
      %p54 = scmp.ne.s32.totalorder %s46, %s49
      %p55 = scmp.eq.s32.totalorder %s15, 0
      %p56 = por %p54, %p55
      %p57 = scmp.ne.s32.totalorder %s46, %s49
      %p58 = scmp.eq.s32.totalorder %s20, 3
      %p59 = por %p57, %p58
      %p60 = scmp.ne.s32.totalorder %s49, %s50
      %p61 = scmp.eq.s32.totalorder %s20, 0
      %p62 = por %p60, %p61
      %p63 = scmp.ne.s32.totalorder %s49, %s50
      %p64 = scmp.eq.s32.totalorder %s21, 3
      %p65 = por %p63, %p64
      %p67 = scmp.ne.s32.totalorder %s50, %s66
      %p68 = scmp.eq.s32.totalorder %s21, 0
      %p69 = por %p67, %p68
      %s70 = ssub.s32 %s15, %s22
      %p71 = scmp.eq.s32.totalorder %s70, 0
      %s73 = sadd.s32 %s72, 1
      %s74 = scalar_select %p71, %s72, %s73
      %p77 = pneg %p71
      %p78 = scmp.eq.s32.totalorder %s15, 3
      %p79 = por %p77, %p78
      %p80 = scmp.ne.s32.totalorder %s72, %s75
      %p81 = scmp.eq.s32.totalorder %s15, 0
      %p82 = por %p80, %p81
      %p83 = scmp.ne.s32.totalorder %s72, %s75
      %p84 = scmp.eq.s32.totalorder %s20, 3
      %p85 = por %p83, %p84
      %p86 = scmp.ne.s32.totalorder %s75, %s76
      %p87 = scmp.eq.s32.totalorder %s20, 0
      %p88 = por %p86, %p87
      %p89 = scmp.ne.s32.totalorder %s75, %s76
      %p90 = scmp.eq.s32.totalorder %s21, 3
      %p91 = por %p89, %p90
      %p93 = scmp.ne.s32.totalorder %s76, %s92
      %p94 = scmp.eq.s32.totalorder %s21, 0
      %p95 = por %p93, %p94
      %p96 = scmp.le.s32.totalorder 1, %s15
      %p97 = scmp.lt.s32.totalorder %s15, 5
      %p98 = pnand %p96, %p97
      %p99 = pneg %p98
      // Predicated region
      $region9: #{tpu_custom_call.1} parent=5 // pred_check
        _
      $region10: #{tpu_custom_call.1} parent=5 // pred_check_branch
        %101 = sbr.rel (%p98) target = $region12
      $region11: #{tpu_custom_call.1} parent=5 // pred_region
        %s102 = ssub.s32 %s15, 1
        // Predicated region
        $region13: #{tpu_custom_call.1} parent=11 // pred_check
          %p103 = pneg %p36
        $region14: #{tpu_custom_call.1} parent=11 // pred_check_branch
          %105 = sbr.rel (%p103) target = $region16
        $region15: #{tpu_custom_call.1} parent=11 // pred_region
          _
        $region16: #{tpu_custom_call.1} parent=11 // pred_fallthru
          _
      $region12: #{tpu_custom_call.1} parent=5 // pred_fallthru
        _
      %p106 = scmp.lt.s32.totalorder %s15, 4
      // Predicated region
      $region17: #{tpu_custom_call.1} parent=5 // pred_check
        %p107 = pneg %p106
      $region18: #{tpu_custom_call.1} parent=5 // pred_check_branch
        %109 = sbr.rel (%p107) target = $region20
      $region19: #{tpu_custom_call.1} parent=5 // pred_region
        // Predicated region
        $region21: #{tpu_custom_call.1} parent=19 // pred_check
          %p110 = pneg %p56
        $region22: #{tpu_custom_call.1} parent=19 // pred_check_branch
          %112 = sbr.rel (%p110) target = $region24
        $region23: #{tpu_custom_call.1} parent=19 // pred_region
          %s113 = sand.u32 %s46, 1
          %s114 = scalar_lea.sflag [#allocation4], %s113
          %s115 = sand.u32 %s46, 1
          %s116 = smul.addr %s115, 2048
          %s117 = scalar_lea.vmem [#allocation3], %s116
          %s118 = smul.u32 32, %s15
          %120 = vsyncadd %s114, 0
          %s121 = smul.addr %s118, 8
          %s122 = smul.addr %s121, 8
          %s123 = scalar_lea.hbm %s1, %s122
          %s124 = sshll.u32 %s123, 4
          %s125 = int_to_ptr.hbm [resolvable:$true] %s124
          %s126 = sshll.u32 %s117, 4
          %s127 = int_to_ptr.vmem [resolvable:$true] %s126
          %132 = dma.hbm_to_vmem [thread:$0]  %s125, 32768, %s127, %s114, 1024, 1024, 64
        $region24: #{tpu_custom_call.1} parent=19 // pred_fallthru
          _
      $region20: #{tpu_custom_call.1} parent=5 // pred_fallthru
        _
      %p133 = scmp.le.s32.totalorder 1, %s15
      %p134 = scmp.lt.s32.totalorder %s15, 5
      %p135 = pnand %p133, %p134
      %p136 = pneg %p135
      // Predicated region
      $region25: #{tpu_custom_call.1} parent=5 // pred_check
        _
      $region26: #{tpu_custom_call.1} parent=5 // pred_check_branch
        %138 = sbr.rel (%p135) target = $region28
      $region27: #{tpu_custom_call.1} parent=5 // pred_region
        %s139 = ssub.s32 %s15, 1
        %s140 = sand.u32 %s49, 1
        %s141 = scalar_lea.sflag [#allocation4], %s140
        %s142 = sand.u32 %s49, 1
        %s143 = smul.addr %s142, 2048
        %s144 = scalar_lea.vmem [#allocation3], %s143
        // Predicated region
        $region29: #{tpu_custom_call.1} parent=27 // pred_check
          %p145 = pneg %p62
        $region30: #{tpu_custom_call.1} parent=27 // pred_check_branch
          %147 = sbr.rel (%p145) target = $region32
        $region31: #{tpu_custom_call.1} parent=27 // pred_region
          %149 = dma.done %s141, 32768
        $region32: #{tpu_custom_call.1} parent=27 // pred_fallthru
          _
        %p150 = pneg %p36
        %p151 = pneg %p33
        %s152 = sand.u32 %s49, 1
        %s153 = scalar_lea.sflag [#allocation4], %s152
        %s154 = sand.u32 %s49, 1
        %s155 = smul.addr %s154, 2048
        %s156 = scalar_lea.vmem [#allocation3], %s155
        %p157 = pneg %p62
        %p158 = pneg %p59
        %p159 = pneg %p88
        %p160 = pneg %p85
        %s161 = sand.u32 %s75, 1
        %s162 = scalar_lea.sflag [#allocation5], %s161
        %s163 = sand.u32 %s75, 1
        %s164 = smul.addr %s163, 2048
        %s165 = scalar_lea.vmem [#allocation6], %s164
        %s166 = smul.u32 32, %s20
        %s167 = smul.u32 32, %s20
        %v168 = vld [vmem:[%s144] sm:$0xff]
        %v169 = vld [vmem:[%s144 + $0x8] sm:$0xff]
        %v170 = vld [vmem:[%s144 + $0x10] sm:$0xff]
        %v171 = vld [vmem:[%s144 + $0x18] sm:$0xff]
        %v172 = vld [vmem:[%s144 + $0x20] sm:$0xff]
        %v173 = vld [vmem:[%s144 + $0x28] sm:$0xff]
        %v174 = vld [vmem:[%s144 + $0x30] sm:$0xff]
        %v175 = vld [vmem:[%s144 + $0x38] sm:$0xff]
        %v176 = vld [vmem:[%s144 + $0x40] sm:$0xff]
        %v177 = vld [vmem:[%s144 + $0x48] sm:$0xff]
        %v178 = vld [vmem:[%s144 + $0x50] sm:$0xff]
        %v179 = vld [vmem:[%s144 + $0x58] sm:$0xff]
        %v180 = vld [vmem:[%s144 + $0x60] sm:$0xff]
        %v181 = vld [vmem:[%s144 + $0x68] sm:$0xff]
        %v182 = vld [vmem:[%s144 + $0x70] sm:$0xff]
        %v183 = vld [vmem:[%s144 + $0x78] sm:$0xff]
        %v184 = vld [vmem:[%s144 + $0x80] sm:$0xff]
        %v185 = vld [vmem:[%s144 + $0x88] sm:$0xff]
        %v186 = vld [vmem:[%s144 + $0x90] sm:$0xff]
        %v187 = vld [vmem:[%s144 + $0x98] sm:$0xff]
        %v188 = vld [vmem:[%s144 + $0xa0] sm:$0xff]
        %v189 = vld [vmem:[%s144 + $0xa8] sm:$0xff]
        %v190 = vld [vmem:[%s144 + $0xb0] sm:$0xff]
        %v191 = vld [vmem:[%s144 + $0xb8] sm:$0xff]
        %v192 = vld [vmem:[%s144 + $0xc0] sm:$0xff]
        %v193 = vld [vmem:[%s144 + $0xc8] sm:$0xff]
        %v194 = vld [vmem:[%s144 + $0xd0] sm:$0xff]
        %v195 = vld [vmem:[%s144 + $0xd8] sm:$0xff]
        %v196 = vld [vmem:[%s144 + $0xe0] sm:$0xff]
        %v197 = vld [vmem:[%s144 + $0xe8] sm:$0xff]
        %v198 = vld [vmem:[%s144 + $0xf0] sm:$0xff]
        %v199 = vld [vmem:[%s144 + $0xf8] sm:$0xff]
        %v200 = vld [vmem:[%s144 + $0x100] sm:$0xff]
        %v201 = vld [vmem:[%s144 + $0x108] sm:$0xff]
        %v202 = vld [vmem:[%s144 + $0x110] sm:$0xff]
        %v203 = vld [vmem:[%s144 + $0x118] sm:$0xff]
        %v204 = vld [vmem:[%s144 + $0x120] sm:$0xff]
        %v205 = vld [vmem:[%s144 + $0x128] sm:$0xff]
        %v206 = vld [vmem:[%s144 + $0x130] sm:$0xff]
        %v207 = vld [vmem:[%s144 + $0x138] sm:$0xff]
        %v208 = vld [vmem:[%s144 + $0x140] sm:$0xff]
        %v209 = vld [vmem:[%s144 + $0x148] sm:$0xff]
        %v210 = vld [vmem:[%s144 + $0x150] sm:$0xff]
        %v211 = vld [vmem:[%s144 + $0x158] sm:$0xff]
        %v212 = vld [vmem:[%s144 + $0x160] sm:$0xff]
        %v213 = vld [vmem:[%s144 + $0x168] sm:$0xff]
        %v214 = vld [vmem:[%s144 + $0x170] sm:$0xff]
        %v215 = vld [vmem:[%s144 + $0x178] sm:$0xff]
        %v216 = vld [vmem:[%s144 + $0x180] sm:$0xff]
        %v217 = vld [vmem:[%s144 + $0x188] sm:$0xff]
        %v218 = vld [vmem:[%s144 + $0x190] sm:$0xff]
        %v219 = vld [vmem:[%s144 + $0x198] sm:$0xff]
        %v220 = vld [vmem:[%s144 + $0x1a0] sm:$0xff]
        %v221 = vld [vmem:[%s144 + $0x1a8] sm:$0xff]
        %v222 = vld [vmem:[%s144 + $0x1b0] sm:$0xff]
        %v223 = vld [vmem:[%s144 + $0x1b8] sm:$0xff]
        %v224 = vld [vmem:[%s144 + $0x1c0] sm:$0xff]
        %v225 = vld [vmem:[%s144 + $0x1c8] sm:$0xff]
        %v226 = vld [vmem:[%s144 + $0x1d0] sm:$0xff]
        %v227 = vld [vmem:[%s144 + $0x1d8] sm:$0xff]
        %v228 = vld [vmem:[%s144 + $0x1e0] sm:$0xff]
        %v229 = vld [vmem:[%s144 + $0x1e8] sm:$0xff]
        %v230 = vld [vmem:[%s144 + $0x1f0] sm:$0xff]
        %v231 = vld [vmem:[%s144 + $0x1f8] sm:$0xff]
        %v232 = vld [vmem:[%s144 + $0x200] sm:$0xff]
        %v233 = vld [vmem:[%s144 + $0x208] sm:$0xff]
        %v234 = vld [vmem:[%s144 + $0x210] sm:$0xff]
        %v235 = vld [vmem:[%s144 + $0x218] sm:$0xff]
        %v236 = vld [vmem:[%s144 + $0x220] sm:$0xff]
        %v237 = vld [vmem:[%s144 + $0x228] sm:$0xff]
        %v238 = vld [vmem:[%s144 + $0x230] sm:$0xff]
        %v239 = vld [vmem:[%s144 + $0x238] sm:$0xff]
        %v240 = vld [vmem:[%s144 + $0x240] sm:$0xff]
        %v241 = vld [vmem:[%s144 + $0x248] sm:$0xff]
        %v242 = vld [vmem:[%s144 + $0x250] sm:$0xff]
        %v243 = vld [vmem:[%s144 + $0x258] sm:$0xff]
        %v244 = vld [vmem:[%s144 + $0x260] sm:$0xff]
        %v245 = vld [vmem:[%s144 + $0x268] sm:$0xff]
        %v246 = vld [vmem:[%s144 + $0x270] sm:$0xff]
        %v247 = vld [vmem:[%s144 + $0x278] sm:$0xff]
        %v248 = vld [vmem:[%s144 + $0x280] sm:$0xff]
        %v249 = vld [vmem:[%s144 + $0x288] sm:$0xff]
        %v250 = vld [vmem:[%s144 + $0x290] sm:$0xff]
        %v251 = vld [vmem:[%s144 + $0x298] sm:$0xff]
        %v252 = vld [vmem:[%s144 + $0x2a0] sm:$0xff]
        %v253 = vld [vmem:[%s144 + $0x2a8] sm:$0xff]
        %v254 = vld [vmem:[%s144 + $0x2b0] sm:$0xff]
        %v255 = vld [vmem:[%s144 + $0x2b8] sm:$0xff]
        %v256 = vld [vmem:[%s144 + $0x2c0] sm:$0xff]
        %v257 = vld [vmem:[%s144 + $0x2c8] sm:$0xff]
        %v258 = vld [vmem:[%s144 + $0x2d0] sm:$0xff]
        %v259 = vld [vmem:[%s144 + $0x2d8] sm:$0xff]
        %v260 = vld [vmem:[%s144 + $0x2e0] sm:$0xff]
        %v261 = vld [vmem:[%s144 + $0x2e8] sm:$0xff]
        %v262 = vld [vmem:[%s144 + $0x2f0] sm:$0xff]
        %v263 = vld [vmem:[%s144 + $0x2f8] sm:$0xff]
        %v264 = vld [vmem:[%s144 + $0x300] sm:$0xff]
        %v265 = vld [vmem:[%s144 + $0x308] sm:$0xff]
        %v266 = vld [vmem:[%s144 + $0x310] sm:$0xff]
        %v267 = vld [vmem:[%s144 + $0x318] sm:$0xff]
        %v268 = vld [vmem:[%s144 + $0x320] sm:$0xff]
        %v269 = vld [vmem:[%s144 + $0x328] sm:$0xff]
        %v270 = vld [vmem:[%s144 + $0x330] sm:$0xff]
        %v271 = vld [vmem:[%s144 + $0x338] sm:$0xff]
        %v272 = vld [vmem:[%s144 + $0x340] sm:$0xff]
        %v273 = vld [vmem:[%s144 + $0x348] sm:$0xff]
        %v274 = vld [vmem:[%s144 + $0x350] sm:$0xff]
        %v275 = vld [vmem:[%s144 + $0x358] sm:$0xff]
        %v276 = vld [vmem:[%s144 + $0x360] sm:$0xff]
        %v277 = vld [vmem:[%s144 + $0x368] sm:$0xff]
        %v278 = vld [vmem:[%s144 + $0x370] sm:$0xff]
        %v279 = vld [vmem:[%s144 + $0x378] sm:$0xff]
        %v280 = vld [vmem:[%s144 + $0x380] sm:$0xff]
        %v281 = vld [vmem:[%s144 + $0x388] sm:$0xff]
        %v282 = vld [vmem:[%s144 + $0x390] sm:$0xff]
        %v283 = vld [vmem:[%s144 + $0x398] sm:$0xff]
        %v284 = vld [vmem:[%s144 + $0x3a0] sm:$0xff]
        %v285 = vld [vmem:[%s144 + $0x3a8] sm:$0xff]
        %v286 = vld [vmem:[%s144 + $0x3b0] sm:$0xff]
        %v287 = vld [vmem:[%s144 + $0x3b8] sm:$0xff]
        %v288 = vld [vmem:[%s144 + $0x3c0] sm:$0xff]
        %v289 = vld [vmem:[%s144 + $0x3c8] sm:$0xff]
        %v290 = vld [vmem:[%s144 + $0x3d0] sm:$0xff]
        %v291 = vld [vmem:[%s144 + $0x3d8] sm:$0xff]
        %v292 = vld [vmem:[%s144 + $0x3e0] sm:$0xff]
        %v293 = vld [vmem:[%s144 + $0x3e8] sm:$0xff]
        %v294 = vld [vmem:[%s144 + $0x3f0] sm:$0xff]
        %v295 = vld [vmem:[%s144 + $0x3f8] sm:$0xff]
        %v296 = vld [vmem:[%s144 + $0x400] sm:$0xff]
        %v297 = vld [vmem:[%s144 + $0x408] sm:$0xff]
        %v298 = vld [vmem:[%s144 + $0x410] sm:$0xff]
        %v299 = vld [vmem:[%s144 + $0x418] sm:$0xff]
        %v300 = vld [vmem:[%s144 + $0x420] sm:$0xff]
        %v301 = vld [vmem:[%s144 + $0x428] sm:$0xff]
        %v302 = vld [vmem:[%s144 + $0x430] sm:$0xff]
        %v303 = vld [vmem:[%s144 + $0x438] sm:$0xff]
        %v304 = vld [vmem:[%s144 + $0x440] sm:$0xff]
        %v305 = vld [vmem:[%s144 + $0x448] sm:$0xff]
        %v306 = vld [vmem:[%s144 + $0x450] sm:$0xff]
        %v307 = vld [vmem:[%s144 + $0x458] sm:$0xff]
        %v308 = vld [vmem:[%s144 + $0x460] sm:$0xff]
        %v309 = vld [vmem:[%s144 + $0x468] sm:$0xff]
        %v310 = vld [vmem:[%s144 + $0x470] sm:$0xff]
        %v311 = vld [vmem:[%s144 + $0x478] sm:$0xff]
        %v312 = vld [vmem:[%s144 + $0x480] sm:$0xff]
        %v313 = vld [vmem:[%s144 + $0x488] sm:$0xff]
        %v314 = vld [vmem:[%s144 + $0x490] sm:$0xff]
        %v315 = vld [vmem:[%s144 + $0x498] sm:$0xff]
        %v316 = vld [vmem:[%s144 + $0x4a0] sm:$0xff]
        %v317 = vld [vmem:[%s144 + $0x4a8] sm:$0xff]
        %v318 = vld [vmem:[%s144 + $0x4b0] sm:$0xff]
        %v319 = vld [vmem:[%s144 + $0x4b8] sm:$0xff]
        %v320 = vld [vmem:[%s144 + $0x4c0] sm:$0xff]
        %v321 = vld [vmem:[%s144 + $0x4c8] sm:$0xff]
        %v322 = vld [vmem:[%s144 + $0x4d0] sm:$0xff]
        %v323 = vld [vmem:[%s144 + $0x4d8] sm:$0xff]
        %v324 = vld [vmem:[%s144 + $0x4e0] sm:$0xff]
        %v325 = vld [vmem:[%s144 + $0x4e8] sm:$0xff]
        %v326 = vld [vmem:[%s144 + $0x4f0] sm:$0xff]
        %v327 = vld [vmem:[%s144 + $0x4f8] sm:$0xff]
        %v328 = vld [vmem:[%s144 + $0x500] sm:$0xff]
        %v329 = vld [vmem:[%s144 + $0x508] sm:$0xff]
        %v330 = vld [vmem:[%s144 + $0x510] sm:$0xff]
        %v331 = vld [vmem:[%s144 + $0x518] sm:$0xff]
        %v332 = vld [vmem:[%s144 + $0x520] sm:$0xff]
        %v333 = vld [vmem:[%s144 + $0x528] sm:$0xff]
        %v334 = vld [vmem:[%s144 + $0x530] sm:$0xff]
        %v335 = vld [vmem:[%s144 + $0x538] sm:$0xff]
        %v336 = vld [vmem:[%s144 + $0x540] sm:$0xff]
        %v337 = vld [vmem:[%s144 + $0x548] sm:$0xff]
        %v338 = vld [vmem:[%s144 + $0x550] sm:$0xff]
        %v339 = vld [vmem:[%s144 + $0x558] sm:$0xff]
        %v340 = vld [vmem:[%s144 + $0x560] sm:$0xff]
        %v341 = vld [vmem:[%s144 + $0x568] sm:$0xff]
        %v342 = vld [vmem:[%s144 + $0x570] sm:$0xff]
        %v343 = vld [vmem:[%s144 + $0x578] sm:$0xff]
        %v344 = vld [vmem:[%s144 + $0x580] sm:$0xff]
        %v345 = vld [vmem:[%s144 + $0x588] sm:$0xff]
        %v346 = vld [vmem:[%s144 + $0x590] sm:$0xff]
        %v347 = vld [vmem:[%s144 + $0x598] sm:$0xff]
        %v348 = vld [vmem:[%s144 + $0x5a0] sm:$0xff]
        %v349 = vld [vmem:[%s144 + $0x5a8] sm:$0xff]
        %v350 = vld [vmem:[%s144 + $0x5b0] sm:$0xff]
        %v351 = vld [vmem:[%s144 + $0x5b8] sm:$0xff]
        %v352 = vld [vmem:[%s144 + $0x5c0] sm:$0xff]
        %v353 = vld [vmem:[%s144 + $0x5c8] sm:$0xff]
        %v354 = vld [vmem:[%s144 + $0x5d0] sm:$0xff]
        %v355 = vld [vmem:[%s144 + $0x5d8] sm:$0xff]
        %v356 = vld [vmem:[%s144 + $0x5e0] sm:$0xff]
        %v357 = vld [vmem:[%s144 + $0x5e8] sm:$0xff]
        %v358 = vld [vmem:[%s144 + $0x5f0] sm:$0xff]
        %v359 = vld [vmem:[%s144 + $0x5f8] sm:$0xff]
        %v360 = vld [vmem:[%s144 + $0x600] sm:$0xff]
        %v361 = vld [vmem:[%s144 + $0x608] sm:$0xff]
        %v362 = vld [vmem:[%s144 + $0x610] sm:$0xff]
        %v363 = vld [vmem:[%s144 + $0x618] sm:$0xff]
        %v364 = vld [vmem:[%s144 + $0x620] sm:$0xff]
        %v365 = vld [vmem:[%s144 + $0x628] sm:$0xff]
        %v366 = vld [vmem:[%s144 + $0x630] sm:$0xff]
        %v367 = vld [vmem:[%s144 + $0x638] sm:$0xff]
        %v368 = vld [vmem:[%s144 + $0x640] sm:$0xff]
        %v369 = vld [vmem:[%s144 + $0x648] sm:$0xff]
        %v370 = vld [vmem:[%s144 + $0x650] sm:$0xff]
        %v371 = vld [vmem:[%s144 + $0x658] sm:$0xff]
        %v372 = vld [vmem:[%s144 + $0x660] sm:$0xff]
        %v373 = vld [vmem:[%s144 + $0x668] sm:$0xff]
        %v374 = vld [vmem:[%s144 + $0x670] sm:$0xff]
        %v375 = vld [vmem:[%s144 + $0x678] sm:$0xff]
        %v376 = vld [vmem:[%s144 + $0x680] sm:$0xff]
        %v377 = vld [vmem:[%s144 + $0x688] sm:$0xff]
        %v378 = vld [vmem:[%s144 + $0x690] sm:$0xff]
        %v379 = vld [vmem:[%s144 + $0x698] sm:$0xff]
        %v380 = vld [vmem:[%s144 + $0x6a0] sm:$0xff]
        %v381 = vld [vmem:[%s144 + $0x6a8] sm:$0xff]
        %v382 = vld [vmem:[%s144 + $0x6b0] sm:$0xff]
        %v383 = vld [vmem:[%s144 + $0x6b8] sm:$0xff]
        %v384 = vld [vmem:[%s144 + $0x6c0] sm:$0xff]
        %v385 = vld [vmem:[%s144 + $0x6c8] sm:$0xff]
        %v386 = vld [vmem:[%s144 + $0x6d0] sm:$0xff]
        %v387 = vld [vmem:[%s144 + $0x6d8] sm:$0xff]
        %v388 = vld [vmem:[%s144 + $0x6e0] sm:$0xff]
        %v389 = vld [vmem:[%s144 + $0x6e8] sm:$0xff]
        %v390 = vld [vmem:[%s144 + $0x6f0] sm:$0xff]
        %v391 = vld [vmem:[%s144 + $0x6f8] sm:$0xff]
        %v392 = vld [vmem:[%s144 + $0x700] sm:$0xff]
        %v393 = vld [vmem:[%s144 + $0x708] sm:$0xff]
        %v394 = vld [vmem:[%s144 + $0x710] sm:$0xff]
        %v395 = vld [vmem:[%s144 + $0x718] sm:$0xff]
        %v396 = vld [vmem:[%s144 + $0x720] sm:$0xff]
        %v397 = vld [vmem:[%s144 + $0x728] sm:$0xff]
        %v398 = vld [vmem:[%s144 + $0x730] sm:$0xff]
        %v399 = vld [vmem:[%s144 + $0x738] sm:$0xff]
        %v400 = vld [vmem:[%s144 + $0x740] sm:$0xff]
        %v401 = vld [vmem:[%s144 + $0x748] sm:$0xff]
        %v402 = vld [vmem:[%s144 + $0x750] sm:$0xff]
        %v403 = vld [vmem:[%s144 + $0x758] sm:$0xff]
        %v404 = vld [vmem:[%s144 + $0x760] sm:$0xff]
        %v405 = vld [vmem:[%s144 + $0x768] sm:$0xff]
        %v406 = vld [vmem:[%s144 + $0x770] sm:$0xff]
        %v407 = vld [vmem:[%s144 + $0x778] sm:$0xff]
        %v408 = vld [vmem:[%s144 + $0x780] sm:$0xff]
        %v409 = vld [vmem:[%s144 + $0x788] sm:$0xff]
        %v410 = vld [vmem:[%s144 + $0x790] sm:$0xff]
        %v411 = vld [vmem:[%s144 + $0x798] sm:$0xff]
        %v412 = vld [vmem:[%s144 + $0x7a0] sm:$0xff]
        %v413 = vld [vmem:[%s144 + $0x7a8] sm:$0xff]
        %v414 = vld [vmem:[%s144 + $0x7b0] sm:$0xff]
        %v415 = vld [vmem:[%s144 + $0x7b8] sm:$0xff]
        %v416 = vld [vmem:[%s144 + $0x7c0] sm:$0xff]
        %v417 = vld [vmem:[%s144 + $0x7c8] sm:$0xff]
        %v418 = vld [vmem:[%s144 + $0x7d0] sm:$0xff]
        %v419 = vld [vmem:[%s144 + $0x7d8] sm:$0xff]
        %v420 = vld [vmem:[%s144 + $0x7e0] sm:$0xff]
        %v421 = vld [vmem:[%s144 + $0x7e8] sm:$0xff]
        %v422 = vld [vmem:[%s144 + $0x7f0] sm:$0xff]
        %v423 = vld [vmem:[%s144 + $0x7f8] sm:$0xff]
        %s424 = sld [smem:[#allocation2]]
        %v425 = vstv %s424
        %v426 = vmul.f32 %v168, %v425
        %v427 = vmul.f32 %v169, %v425
        %v428 = vmul.f32 %v170, %v425
        %v429 = vmul.f32 %v171, %v425
        %v430 = vmul.f32 %v172, %v425
        %v431 = vmul.f32 %v173, %v425
        %v432 = vmul.f32 %v174, %v425
        %v433 = vmul.f32 %v175, %v425
        %v434 = vmul.f32 %v176, %v425
        %v435 = vmul.f32 %v177, %v425
        %v436 = vmul.f32 %v178, %v425
        %v437 = vmul.f32 %v179, %v425
        %v438 = vmul.f32 %v180, %v425
        %v439 = vmul.f32 %v181, %v425
        %v440 = vmul.f32 %v182, %v425
        %v441 = vmul.f32 %v183, %v425
        %v442 = vmul.f32 %v184, %v425
        %v443 = vmul.f32 %v185, %v425
        %v444 = vmul.f32 %v186, %v425
        %v445 = vmul.f32 %v187, %v425
        %v446 = vmul.f32 %v188, %v425
        %v447 = vmul.f32 %v189, %v425
        %v448 = vmul.f32 %v190, %v425
        %v449 = vmul.f32 %v191, %v425
        %v450 = vmul.f32 %v192, %v425
        %v451 = vmul.f32 %v193, %v425
        %v452 = vmul.f32 %v194, %v425
        %v453 = vmul.f32 %v195, %v425
        %v454 = vmul.f32 %v196, %v425
        %v455 = vmul.f32 %v197, %v425
        %v456 = vmul.f32 %v198, %v425
        %v457 = vmul.f32 %v199, %v425
        %v458 = vmul.f32 %v200, %v425
        %v459 = vmul.f32 %v201, %v425
        %v460 = vmul.f32 %v202, %v425
        %v461 = vmul.f32 %v203, %v425
        %v462 = vmul.f32 %v204, %v425
        %v463 = vmul.f32 %v205, %v425
        %v464 = vmul.f32 %v206, %v425
        %v465 = vmul.f32 %v207, %v425
        %v466 = vmul.f32 %v208, %v425
        %v467 = vmul.f32 %v209, %v425
        %v468 = vmul.f32 %v210, %v425
        %v469 = vmul.f32 %v211, %v425
        %v470 = vmul.f32 %v212, %v425
        %v471 = vmul.f32 %v213, %v425
        %v472 = vmul.f32 %v214, %v425
        %v473 = vmul.f32 %v215, %v425
        %v474 = vmul.f32 %v216, %v425
        %v475 = vmul.f32 %v217, %v425
        %v476 = vmul.f32 %v218, %v425
        %v477 = vmul.f32 %v219, %v425
        %v478 = vmul.f32 %v220, %v425
        %v479 = vmul.f32 %v221, %v425
        %v480 = vmul.f32 %v222, %v425
        %v481 = vmul.f32 %v223, %v425
        %v482 = vmul.f32 %v224, %v425
        %v483 = vmul.f32 %v225, %v425
        %v484 = vmul.f32 %v226, %v425
        %v485 = vmul.f32 %v227, %v425
        %v486 = vmul.f32 %v228, %v425
        %v487 = vmul.f32 %v229, %v425
        %v488 = vmul.f32 %v230, %v425
        %v489 = vmul.f32 %v231, %v425
        %v490 = vmul.f32 %v232, %v425
        %v491 = vmul.f32 %v233, %v425
        %v492 = vmul.f32 %v234, %v425
        %v493 = vmul.f32 %v235, %v425
        %v494 = vmul.f32 %v236, %v425
        %v495 = vmul.f32 %v237, %v425
        %v496 = vmul.f32 %v238, %v425
        %v497 = vmul.f32 %v239, %v425
        %v498 = vmul.f32 %v240, %v425
        %v499 = vmul.f32 %v241, %v425
        %v500 = vmul.f32 %v242, %v425
        %v501 = vmul.f32 %v243, %v425
        %v502 = vmul.f32 %v244, %v425
        %v503 = vmul.f32 %v245, %v425
        %v504 = vmul.f32 %v246, %v425
        %v505 = vmul.f32 %v247, %v425
        %v506 = vmul.f32 %v248, %v425
        %v507 = vmul.f32 %v249, %v425
        %v508 = vmul.f32 %v250, %v425
        %v509 = vmul.f32 %v251, %v425
        %v510 = vmul.f32 %v252, %v425
        %v511 = vmul.f32 %v253, %v425
        %v512 = vmul.f32 %v254, %v425
        %v513 = vmul.f32 %v255, %v425
        %v514 = vmul.f32 %v256, %v425
        %v515 = vmul.f32 %v257, %v425
        %v516 = vmul.f32 %v258, %v425
        %v517 = vmul.f32 %v259, %v425
        %v518 = vmul.f32 %v260, %v425
        %v519 = vmul.f32 %v261, %v425
        %v520 = vmul.f32 %v262, %v425
        %v521 = vmul.f32 %v263, %v425
        %v522 = vmul.f32 %v264, %v425
        %v523 = vmul.f32 %v265, %v425
        %v524 = vmul.f32 %v266, %v425
        %v525 = vmul.f32 %v267, %v425
        %v526 = vmul.f32 %v268, %v425
        %v527 = vmul.f32 %v269, %v425
        %v528 = vmul.f32 %v270, %v425
        %v529 = vmul.f32 %v271, %v425
        %v530 = vmul.f32 %v272, %v425
        %v531 = vmul.f32 %v273, %v425
        %v532 = vmul.f32 %v274, %v425
        %v533 = vmul.f32 %v275, %v425
        %v534 = vmul.f32 %v276, %v425
        %v535 = vmul.f32 %v277, %v425
        %v536 = vmul.f32 %v278, %v425
        %v537 = vmul.f32 %v279, %v425
        %v538 = vmul.f32 %v280, %v425
        %v539 = vmul.f32 %v281, %v425
        %v540 = vmul.f32 %v282, %v425
        %v541 = vmul.f32 %v283, %v425
        %v542 = vmul.f32 %v284, %v425
        %v543 = vmul.f32 %v285, %v425
        %v544 = vmul.f32 %v286, %v425
        %v545 = vmul.f32 %v287, %v425
        %v546 = vmul.f32 %v288, %v425
        %v547 = vmul.f32 %v289, %v425
        %v548 = vmul.f32 %v290, %v425
        %v549 = vmul.f32 %v291, %v425
        %v550 = vmul.f32 %v292, %v425
        %v551 = vmul.f32 %v293, %v425
        %v552 = vmul.f32 %v294, %v425
        %v553 = vmul.f32 %v295, %v425
        %v554 = vmul.f32 %v296, %v425
        %v555 = vmul.f32 %v297, %v425
        %v556 = vmul.f32 %v298, %v425
        %v557 = vmul.f32 %v299, %v425
        %v558 = vmul.f32 %v300, %v425
        %v559 = vmul.f32 %v301, %v425
        %v560 = vmul.f32 %v302, %v425
        %v561 = vmul.f32 %v303, %v425
        %v562 = vmul.f32 %v304, %v425
        %v563 = vmul.f32 %v305, %v425
        %v564 = vmul.f32 %v306, %v425
        %v565 = vmul.f32 %v307, %v425
        %v566 = vmul.f32 %v308, %v425
        %v567 = vmul.f32 %v309, %v425
        %v568 = vmul.f32 %v310, %v425
        %v569 = vmul.f32 %v311, %v425
        %v570 = vmul.f32 %v312, %v425
        %v571 = vmul.f32 %v313, %v425
        %v572 = vmul.f32 %v314, %v425
        %v573 = vmul.f32 %v315, %v425
        %v574 = vmul.f32 %v316, %v425
        %v575 = vmul.f32 %v317, %v425
        %v576 = vmul.f32 %v318, %v425
        %v577 = vmul.f32 %v319, %v425
        %v578 = vmul.f32 %v320, %v425
        %v579 = vmul.f32 %v321, %v425
        %v580 = vmul.f32 %v322, %v425
        %v581 = vmul.f32 %v323, %v425
        %v582 = vmul.f32 %v324, %v425
        %v583 = vmul.f32 %v325, %v425
        %v584 = vmul.f32 %v326, %v425
        %v585 = vmul.f32 %v327, %v425
        %v586 = vmul.f32 %v328, %v425
        %v587 = vmul.f32 %v329, %v425
        %v588 = vmul.f32 %v330, %v425
        %v589 = vmul.f32 %v331, %v425
        %v590 = vmul.f32 %v332, %v425
        %v591 = vmul.f32 %v333, %v425
        %v592 = vmul.f32 %v334, %v425
        %v593 = vmul.f32 %v335, %v425
        %v594 = vmul.f32 %v336, %v425
        %v595 = vmul.f32 %v337, %v425
        %v596 = vmul.f32 %v338, %v425
        %v597 = vmul.f32 %v339, %v425
        %v598 = vmul.f32 %v340, %v425
        %v599 = vmul.f32 %v341, %v425
        %v600 = vmul.f32 %v342, %v425
        %v601 = vmul.f32 %v343, %v425
        %v602 = vmul.f32 %v344, %v425
        %v603 = vmul.f32 %v345, %v425
        %v604 = vmul.f32 %v346, %v425
        %v605 = vmul.f32 %v347, %v425
        %v606 = vmul.f32 %v348, %v425
        %v607 = vmul.f32 %v349, %v425
        %v608 = vmul.f32 %v350, %v425
        %v609 = vmul.f32 %v351, %v425
        %v610 = vmul.f32 %v352, %v425
        %v611 = vmul.f32 %v353, %v425
        %v612 = vmul.f32 %v354, %v425
        %v613 = vmul.f32 %v355, %v425
        %v614 = vmul.f32 %v356, %v425
        %v615 = vmul.f32 %v357, %v425
        %v616 = vmul.f32 %v358, %v425
        %v617 = vmul.f32 %v359, %v425
        %v618 = vmul.f32 %v360, %v425
        %v619 = vmul.f32 %v361, %v425
        %v620 = vmul.f32 %v362, %v425
        %v621 = vmul.f32 %v363, %v425
        %v622 = vmul.f32 %v364, %v425
        %v623 = vmul.f32 %v365, %v425
        %v624 = vmul.f32 %v366, %v425
        %v625 = vmul.f32 %v367, %v425
        %v626 = vmul.f32 %v368, %v425
        %v627 = vmul.f32 %v369, %v425
        %v628 = vmul.f32 %v370, %v425
        %v629 = vmul.f32 %v371, %v425
        %v630 = vmul.f32 %v372, %v425
        %v631 = vmul.f32 %v373, %v425
        %v632 = vmul.f32 %v374, %v425
        %v633 = vmul.f32 %v375, %v425
        %v634 = vmul.f32 %v376, %v425
        %v635 = vmul.f32 %v377, %v425
        %v636 = vmul.f32 %v378, %v425
        %v637 = vmul.f32 %v379, %v425
        %v638 = vmul.f32 %v380, %v425
        %v639 = vmul.f32 %v381, %v425
        %v640 = vmul.f32 %v382, %v425
        %v641 = vmul.f32 %v383, %v425
        %v642 = vmul.f32 %v384, %v425
        %v643 = vmul.f32 %v385, %v425
        %v644 = vmul.f32 %v386, %v425
        %v645 = vmul.f32 %v387, %v425
        %v646 = vmul.f32 %v388, %v425
        %v647 = vmul.f32 %v389, %v425
        %v648 = vmul.f32 %v390, %v425
        %v649 = vmul.f32 %v391, %v425
        %v650 = vmul.f32 %v392, %v425
        %v651 = vmul.f32 %v393, %v425
        %v652 = vmul.f32 %v394, %v425
        %v653 = vmul.f32 %v395, %v425
        %v654 = vmul.f32 %v396, %v425
        %v655 = vmul.f32 %v397, %v425
        %v656 = vmul.f32 %v398, %v425
        %v657 = vmul.f32 %v399, %v425
        %v658 = vmul.f32 %v400, %v425
        %v659 = vmul.f32 %v401, %v425
        %v660 = vmul.f32 %v402, %v425
        %v661 = vmul.f32 %v403, %v425
        %v662 = vmul.f32 %v404, %v425
        %v663 = vmul.f32 %v405, %v425
        %v664 = vmul.f32 %v406, %v425
        %v665 = vmul.f32 %v407, %v425
        %v666 = vmul.f32 %v408, %v425
        %v667 = vmul.f32 %v409, %v425
        %v668 = vmul.f32 %v410, %v425
        %v669 = vmul.f32 %v411, %v425
        %v670 = vmul.f32 %v412, %v425
        %v671 = vmul.f32 %v413, %v425
        %v672 = vmul.f32 %v414, %v425
        %v673 = vmul.f32 %v415, %v425
        %v674 = vmul.f32 %v416, %v425
        %v675 = vmul.f32 %v417, %v425
        %v676 = vmul.f32 %v418, %v425
        %v677 = vmul.f32 %v419, %v425
        %v678 = vmul.f32 %v420, %v425
        %v679 = vmul.f32 %v421, %v425
        %v680 = vmul.f32 %v422, %v425
        %v681 = vmul.f32 %v423, %v425
        %682 = vst [vmem:[%s165] sm:$0xff] %v426
        %683 = vst [vmem:[%s165 + $0x8] sm:$0xff] %v427
        %684 = vst [vmem:[%s165 + $0x10] sm:$0xff] %v428
        %685 = vst [vmem:[%s165 + $0x18] sm:$0xff] %v429
        %686 = vst [vmem:[%s165 + $0x20] sm:$0xff] %v430
        %687 = vst [vmem:[%s165 + $0x28] sm:$0xff] %v431
        %688 = vst [vmem:[%s165 + $0x30] sm:$0xff] %v432
        %689 = vst [vmem:[%s165 + $0x38] sm:$0xff] %v433
        %690 = vst [vmem:[%s165 + $0x40] sm:$0xff] %v434
        %691 = vst [vmem:[%s165 + $0x48] sm:$0xff] %v435
        %692 = vst [vmem:[%s165 + $0x50] sm:$0xff] %v436
        %693 = vst [vmem:[%s165 + $0x58] sm:$0xff] %v437
        %694 = vst [vmem:[%s165 + $0x60] sm:$0xff] %v438
        %695 = vst [vmem:[%s165 + $0x68] sm:$0xff] %v439
        %696 = vst [vmem:[%s165 + $0x70] sm:$0xff] %v440
        %697 = vst [vmem:[%s165 + $0x78] sm:$0xff] %v441
        %698 = vst [vmem:[%s165 + $0x80] sm:$0xff] %v442
        %699 = vst [vmem:[%s165 + $0x88] sm:$0xff] %v443
        %700 = vst [vmem:[%s165 + $0x90] sm:$0xff] %v444
        %701 = vst [vmem:[%s165 + $0x98] sm:$0xff] %v445
        %702 = vst [vmem:[%s165 + $0xa0] sm:$0xff] %v446
        %703 = vst [vmem:[%s165 + $0xa8] sm:$0xff] %v447
        %704 = vst [vmem:[%s165 + $0xb0] sm:$0xff] %v448
        %705 = vst [vmem:[%s165 + $0xb8] sm:$0xff] %v449
        %706 = vst [vmem:[%s165 + $0xc0] sm:$0xff] %v450
        %707 = vst [vmem:[%s165 + $0xc8] sm:$0xff] %v451
        %708 = vst [vmem:[%s165 + $0xd0] sm:$0xff] %v452
        %709 = vst [vmem:[%s165 + $0xd8] sm:$0xff] %v453
        %710 = vst [vmem:[%s165 + $0xe0] sm:$0xff] %v454
        %711 = vst [vmem:[%s165 + $0xe8] sm:$0xff] %v455
        %712 = vst [vmem:[%s165 + $0xf0] sm:$0xff] %v456
        %713 = vst [vmem:[%s165 + $0xf8] sm:$0xff] %v457
        %714 = vst [vmem:[%s165 + $0x100] sm:$0xff] %v458
        %715 = vst [vmem:[%s165 + $0x108] sm:$0xff] %v459
        %716 = vst [vmem:[%s165 + $0x110] sm:$0xff] %v460
        %717 = vst [vmem:[%s165 + $0x118] sm:$0xff] %v461
        %718 = vst [vmem:[%s165 + $0x120] sm:$0xff] %v462
        %719 = vst [vmem:[%s165 + $0x128] sm:$0xff] %v463
        %720 = vst [vmem:[%s165 + $0x130] sm:$0xff] %v464
        %721 = vst [vmem:[%s165 + $0x138] sm:$0xff] %v465
        %722 = vst [vmem:[%s165 + $0x140] sm:$0xff] %v466
        %723 = vst [vmem:[%s165 + $0x148] sm:$0xff] %v467
        %724 = vst [vmem:[%s165 + $0x150] sm:$0xff] %v468
        %725 = vst [vmem:[%s165 + $0x158] sm:$0xff] %v469
        %726 = vst [vmem:[%s165 + $0x160] sm:$0xff] %v470
        %727 = vst [vmem:[%s165 + $0x168] sm:$0xff] %v471
        %728 = vst [vmem:[%s165 + $0x170] sm:$0xff] %v472
        %729 = vst [vmem:[%s165 + $0x178] sm:$0xff] %v473
        %730 = vst [vmem:[%s165 + $0x180] sm:$0xff] %v474
        %731 = vst [vmem:[%s165 + $0x188] sm:$0xff] %v475
        %732 = vst [vmem:[%s165 + $0x190] sm:$0xff] %v476
        %733 = vst [vmem:[%s165 + $0x198] sm:$0xff] %v477
        %734 = vst [vmem:[%s165 + $0x1a0] sm:$0xff] %v478
        %735 = vst [vmem:[%s165 + $0x1a8] sm:$0xff] %v479
        %736 = vst [vmem:[%s165 + $0x1b0] sm:$0xff] %v480
        %737 = vst [vmem:[%s165 + $0x1b8] sm:$0xff] %v481
        %738 = vst [vmem:[%s165 + $0x1c0] sm:$0xff] %v482
        %739 = vst [vmem:[%s165 + $0x1c8] sm:$0xff] %v483
        %740 = vst [vmem:[%s165 + $0x1d0] sm:$0xff] %v484
        %741 = vst [vmem:[%s165 + $0x1d8] sm:$0xff] %v485
        %742 = vst [vmem:[%s165 + $0x1e0] sm:$0xff] %v486
        %743 = vst [vmem:[%s165 + $0x1e8] sm:$0xff] %v487
        %744 = vst [vmem:[%s165 + $0x1f0] sm:$0xff] %v488
        %745 = vst [vmem:[%s165 + $0x1f8] sm:$0xff] %v489
        %746 = vst [vmem:[%s165 + $0x200] sm:$0xff] %v490
        %747 = vst [vmem:[%s165 + $0x208] sm:$0xff] %v491
        %748 = vst [vmem:[%s165 + $0x210] sm:$0xff] %v492
        %749 = vst [vmem:[%s165 + $0x218] sm:$0xff] %v493
        %750 = vst [vmem:[%s165 + $0x220] sm:$0xff] %v494
        %751 = vst [vmem:[%s165 + $0x228] sm:$0xff] %v495
        %752 = vst [vmem:[%s165 + $0x230] sm:$0xff] %v496
        %753 = vst [vmem:[%s165 + $0x238] sm:$0xff] %v497
        %754 = vst [vmem:[%s165 + $0x240] sm:$0xff] %v498
        %755 = vst [vmem:[%s165 + $0x248] sm:$0xff] %v499
        %756 = vst [vmem:[%s165 + $0x250] sm:$0xff] %v500
        %757 = vst [vmem:[%s165 + $0x258] sm:$0xff] %v501
        %758 = vst [vmem:[%s165 + $0x260] sm:$0xff] %v502
        %759 = vst [vmem:[%s165 + $0x268] sm:$0xff] %v503
        %760 = vst [vmem:[%s165 + $0x270] sm:$0xff] %v504
        %761 = vst [vmem:[%s165 + $0x278] sm:$0xff] %v505
        %762 = vst [vmem:[%s165 + $0x280] sm:$0xff] %v506
        %763 = vst [vmem:[%s165 + $0x288] sm:$0xff] %v507
        %764 = vst [vmem:[%s165 + $0x290] sm:$0xff] %v508
        %765 = vst [vmem:[%s165 + $0x298] sm:$0xff] %v509
        %766 = vst [vmem:[%s165 + $0x2a0] sm:$0xff] %v510
        %767 = vst [vmem:[%s165 + $0x2a8] sm:$0xff] %v511
        %768 = vst [vmem:[%s165 + $0x2b0] sm:$0xff] %v512
        %769 = vst [vmem:[%s165 + $0x2b8] sm:$0xff] %v513
        %770 = vst [vmem:[%s165 + $0x2c0] sm:$0xff] %v514
        %771 = vst [vmem:[%s165 + $0x2c8] sm:$0xff] %v515
        %772 = vst [vmem:[%s165 + $0x2d0] sm:$0xff] %v516
        %773 = vst [vmem:[%s165 + $0x2d8] sm:$0xff] %v517
        %774 = vst [vmem:[%s165 + $0x2e0] sm:$0xff] %v518
        %775 = vst [vmem:[%s165 + $0x2e8] sm:$0xff] %v519
        %776 = vst [vmem:[%s165 + $0x2f0] sm:$0xff] %v520
        %777 = vst [vmem:[%s165 + $0x2f8] sm:$0xff] %v521
        %778 = vst [vmem:[%s165 + $0x300] sm:$0xff] %v522
        %779 = vst [vmem:[%s165 + $0x308] sm:$0xff] %v523
        %780 = vst [vmem:[%s165 + $0x310] sm:$0xff] %v524
        %781 = vst [vmem:[%s165 + $0x318] sm:$0xff] %v525
        %782 = vst [vmem:[%s165 + $0x320] sm:$0xff] %v526
        %783 = vst [vmem:[%s165 + $0x328] sm:$0xff] %v527
        %784 = vst [vmem:[%s165 + $0x330] sm:$0xff] %v528
        %785 = vst [vmem:[%s165 + $0x338] sm:$0xff] %v529
        %786 = vst [vmem:[%s165 + $0x340] sm:$0xff] %v530
        %787 = vst [vmem:[%s165 + $0x348] sm:$0xff] %v531
        %788 = vst [vmem:[%s165 + $0x350] sm:$0xff] %v532
        %789 = vst [vmem:[%s165 + $0x358] sm:$0xff] %v533
        %790 = vst [vmem:[%s165 + $0x360] sm:$0xff] %v534
        %791 = vst [vmem:[%s165 + $0x368] sm:$0xff] %v535
        %792 = vst [vmem:[%s165 + $0x370] sm:$0xff] %v536
        %793 = vst [vmem:[%s165 + $0x378] sm:$0xff] %v537
        %794 = vst [vmem:[%s165 + $0x380] sm:$0xff] %v538
        %795 = vst [vmem:[%s165 + $0x388] sm:$0xff] %v539
        %796 = vst [vmem:[%s165 + $0x390] sm:$0xff] %v540
        %797 = vst [vmem:[%s165 + $0x398] sm:$0xff] %v541
        %798 = vst [vmem:[%s165 + $0x3a0] sm:$0xff] %v542
        %799 = vst [vmem:[%s165 + $0x3a8] sm:$0xff] %v543
        %800 = vst [vmem:[%s165 + $0x3b0] sm:$0xff] %v544
        %801 = vst [vmem:[%s165 + $0x3b8] sm:$0xff] %v545
        %802 = vst [vmem:[%s165 + $0x3c0] sm:$0xff] %v546
        %803 = vst [vmem:[%s165 + $0x3c8] sm:$0xff] %v547
        %804 = vst [vmem:[%s165 + $0x3d0] sm:$0xff] %v548
        %805 = vst [vmem:[%s165 + $0x3d8] sm:$0xff] %v549
        %806 = vst [vmem:[%s165 + $0x3e0] sm:$0xff] %v550
        %807 = vst [vmem:[%s165 + $0x3e8] sm:$0xff] %v551
        %808 = vst [vmem:[%s165 + $0x3f0] sm:$0xff] %v552
        %809 = vst [vmem:[%s165 + $0x3f8] sm:$0xff] %v553
        %810 = vst [vmem:[%s165 + $0x400] sm:$0xff] %v554
        %811 = vst [vmem:[%s165 + $0x408] sm:$0xff] %v555
        %812 = vst [vmem:[%s165 + $0x410] sm:$0xff] %v556
        %813 = vst [vmem:[%s165 + $0x418] sm:$0xff] %v557
        %814 = vst [vmem:[%s165 + $0x420] sm:$0xff] %v558
        %815 = vst [vmem:[%s165 + $0x428] sm:$0xff] %v559
        %816 = vst [vmem:[%s165 + $0x430] sm:$0xff] %v560
        %817 = vst [vmem:[%s165 + $0x438] sm:$0xff] %v561
        %818 = vst [vmem:[%s165 + $0x440] sm:$0xff] %v562
        %819 = vst [vmem:[%s165 + $0x448] sm:$0xff] %v563
        %820 = vst [vmem:[%s165 + $0x450] sm:$0xff] %v564
        %821 = vst [vmem:[%s165 + $0x458] sm:$0xff] %v565
        %822 = vst [vmem:[%s165 + $0x460] sm:$0xff] %v566
        %823 = vst [vmem:[%s165 + $0x468] sm:$0xff] %v567
        %824 = vst [vmem:[%s165 + $0x470] sm:$0xff] %v568
        %825 = vst [vmem:[%s165 + $0x478] sm:$0xff] %v569
        %826 = vst [vmem:[%s165 + $0x480] sm:$0xff] %v570
        %827 = vst [vmem:[%s165 + $0x488] sm:$0xff] %v571
        %828 = vst [vmem:[%s165 + $0x490] sm:$0xff] %v572
        %829 = vst [vmem:[%s165 + $0x498] sm:$0xff] %v573
        %830 = vst [vmem:[%s165 + $0x4a0] sm:$0xff] %v574
        %831 = vst [vmem:[%s165 + $0x4a8] sm:$0xff] %v575
        %832 = vst [vmem:[%s165 + $0x4b0] sm:$0xff] %v576
        %833 = vst [vmem:[%s165 + $0x4b8] sm:$0xff] %v577
        %834 = vst [vmem:[%s165 + $0x4c0] sm:$0xff] %v578
        %835 = vst [vmem:[%s165 + $0x4c8] sm:$0xff] %v579
        %836 = vst [vmem:[%s165 + $0x4d0] sm:$0xff] %v580
        %837 = vst [vmem:[%s165 + $0x4d8] sm:$0xff] %v581
        %838 = vst [vmem:[%s165 + $0x4e0] sm:$0xff] %v582
        %839 = vst [vmem:[%s165 + $0x4e8] sm:$0xff] %v583
        %840 = vst [vmem:[%s165 + $0x4f0] sm:$0xff] %v584
        %841 = vst [vmem:[%s165 + $0x4f8] sm:$0xff] %v585
        %842 = vst [vmem:[%s165 + $0x500] sm:$0xff] %v586
        %843 = vst [vmem:[%s165 + $0x508] sm:$0xff] %v587
        %844 = vst [vmem:[%s165 + $0x510] sm:$0xff] %v588
        %845 = vst [vmem:[%s165 + $0x518] sm:$0xff] %v589
        %846 = vst [vmem:[%s165 + $0x520] sm:$0xff] %v590
        %847 = vst [vmem:[%s165 + $0x528] sm:$0xff] %v591
        %848 = vst [vmem:[%s165 + $0x530] sm:$0xff] %v592
        %849 = vst [vmem:[%s165 + $0x538] sm:$0xff] %v593
        %850 = vst [vmem:[%s165 + $0x540] sm:$0xff] %v594
        %851 = vst [vmem:[%s165 + $0x548] sm:$0xff] %v595
        %852 = vst [vmem:[%s165 + $0x550] sm:$0xff] %v596
        %853 = vst [vmem:[%s165 + $0x558] sm:$0xff] %v597
        %854 = vst [vmem:[%s165 + $0x560] sm:$0xff] %v598
        %855 = vst [vmem:[%s165 + $0x568] sm:$0xff] %v599
        %856 = vst [vmem:[%s165 + $0x570] sm:$0xff] %v600
        %857 = vst [vmem:[%s165 + $0x578] sm:$0xff] %v601
        %858 = vst [vmem:[%s165 + $0x580] sm:$0xff] %v602
        %859 = vst [vmem:[%s165 + $0x588] sm:$0xff] %v603
        %860 = vst [vmem:[%s165 + $0x590] sm:$0xff] %v604
        %861 = vst [vmem:[%s165 + $0x598] sm:$0xff] %v605
        %862 = vst [vmem:[%s165 + $0x5a0] sm:$0xff] %v606
        %863 = vst [vmem:[%s165 + $0x5a8] sm:$0xff] %v607
        %864 = vst [vmem:[%s165 + $0x5b0] sm:$0xff] %v608
        %865 = vst [vmem:[%s165 + $0x5b8] sm:$0xff] %v609
        %866 = vst [vmem:[%s165 + $0x5c0] sm:$0xff] %v610
        %867 = vst [vmem:[%s165 + $0x5c8] sm:$0xff] %v611
        %868 = vst [vmem:[%s165 + $0x5d0] sm:$0xff] %v612
        %869 = vst [vmem:[%s165 + $0x5d8] sm:$0xff] %v613
        %870 = vst [vmem:[%s165 + $0x5e0] sm:$0xff] %v614
        %871 = vst [vmem:[%s165 + $0x5e8] sm:$0xff] %v615
        %872 = vst [vmem:[%s165 + $0x5f0] sm:$0xff] %v616
        %873 = vst [vmem:[%s165 + $0x5f8] sm:$0xff] %v617
        %874 = vst [vmem:[%s165 + $0x600] sm:$0xff] %v618
        %875 = vst [vmem:[%s165 + $0x608] sm:$0xff] %v619
        %876 = vst [vmem:[%s165 + $0x610] sm:$0xff] %v620
        %877 = vst [vmem:[%s165 + $0x618] sm:$0xff] %v621
        %878 = vst [vmem:[%s165 + $0x620] sm:$0xff] %v622
        %879 = vst [vmem:[%s165 + $0x628] sm:$0xff] %v623
        %880 = vst [vmem:[%s165 + $0x630] sm:$0xff] %v624
        %881 = vst [vmem:[%s165 + $0x638] sm:$0xff] %v625
        %882 = vst [vmem:[%s165 + $0x640] sm:$0xff] %v626
        %883 = vst [vmem:[%s165 + $0x648] sm:$0xff] %v627
        %884 = vst [vmem:[%s165 + $0x650] sm:$0xff] %v628
        %885 = vst [vmem:[%s165 + $0x658] sm:$0xff] %v629
        %886 = vst [vmem:[%s165 + $0x660] sm:$0xff] %v630
        %887 = vst [vmem:[%s165 + $0x668] sm:$0xff] %v631
        %888 = vst [vmem:[%s165 + $0x670] sm:$0xff] %v632
        %889 = vst [vmem:[%s165 + $0x678] sm:$0xff] %v633
        %890 = vst [vmem:[%s165 + $0x680] sm:$0xff] %v634
        %891 = vst [vmem:[%s165 + $0x688] sm:$0xff] %v635
        %892 = vst [vmem:[%s165 + $0x690] sm:$0xff] %v636
        %893 = vst [vmem:[%s165 + $0x698] sm:$0xff] %v637
        %894 = vst [vmem:[%s165 + $0x6a0] sm:$0xff] %v638
        %895 = vst [vmem:[%s165 + $0x6a8] sm:$0xff] %v639
        %896 = vst [vmem:[%s165 + $0x6b0] sm:$0xff] %v640
        %897 = vst [vmem:[%s165 + $0x6b8] sm:$0xff] %v641
        %898 = vst [vmem:[%s165 + $0x6c0] sm:$0xff] %v642
        %899 = vst [vmem:[%s165 + $0x6c8] sm:$0xff] %v643
        %900 = vst [vmem:[%s165 + $0x6d0] sm:$0xff] %v644
        %901 = vst [vmem:[%s165 + $0x6d8] sm:$0xff] %v645
        %902 = vst [vmem:[%s165 + $0x6e0] sm:$0xff] %v646
        %903 = vst [vmem:[%s165 + $0x6e8] sm:$0xff] %v647
        %904 = vst [vmem:[%s165 + $0x6f0] sm:$0xff] %v648
        %905 = vst [vmem:[%s165 + $0x6f8] sm:$0xff] %v649
        %906 = vst [vmem:[%s165 + $0x700] sm:$0xff] %v650
        %907 = vst [vmem:[%s165 + $0x708] sm:$0xff] %v651
        %908 = vst [vmem:[%s165 + $0x710] sm:$0xff] %v652
        %909 = vst [vmem:[%s165 + $0x718] sm:$0xff] %v653
        %910 = vst [vmem:[%s165 + $0x720] sm:$0xff] %v654
        %911 = vst [vmem:[%s165 + $0x728] sm:$0xff] %v655
        %912 = vst [vmem:[%s165 + $0x730] sm:$0xff] %v656
        %913 = vst [vmem:[%s165 + $0x738] sm:$0xff] %v657
        %914 = vst [vmem:[%s165 + $0x740] sm:$0xff] %v658
        %915 = vst [vmem:[%s165 + $0x748] sm:$0xff] %v659
        %916 = vst [vmem:[%s165 + $0x750] sm:$0xff] %v660
        %917 = vst [vmem:[%s165 + $0x758] sm:$0xff] %v661
        %918 = vst [vmem:[%s165 + $0x760] sm:$0xff] %v662
        %919 = vst [vmem:[%s165 + $0x768] sm:$0xff] %v663
        %920 = vst [vmem:[%s165 + $0x770] sm:$0xff] %v664
        %921 = vst [vmem:[%s165 + $0x778] sm:$0xff] %v665
        %922 = vst [vmem:[%s165 + $0x780] sm:$0xff] %v666
        %923 = vst [vmem:[%s165 + $0x788] sm:$0xff] %v667
        %924 = vst [vmem:[%s165 + $0x790] sm:$0xff] %v668
        %925 = vst [vmem:[%s165 + $0x798] sm:$0xff] %v669
        %926 = vst [vmem:[%s165 + $0x7a0] sm:$0xff] %v670
        %927 = vst [vmem:[%s165 + $0x7a8] sm:$0xff] %v671
        %928 = vst [vmem:[%s165 + $0x7b0] sm:$0xff] %v672
        %929 = vst [vmem:[%s165 + $0x7b8] sm:$0xff] %v673
        %930 = vst [vmem:[%s165 + $0x7c0] sm:$0xff] %v674
        %931 = vst [vmem:[%s165 + $0x7c8] sm:$0xff] %v675
        %932 = vst [vmem:[%s165 + $0x7d0] sm:$0xff] %v676
        %933 = vst [vmem:[%s165 + $0x7d8] sm:$0xff] %v677
        %934 = vst [vmem:[%s165 + $0x7e0] sm:$0xff] %v678
        %935 = vst [vmem:[%s165 + $0x7e8] sm:$0xff] %v679
        %936 = vst [vmem:[%s165 + $0x7f0] sm:$0xff] %v680
        %937 = vst [vmem:[%s165 + $0x7f8] sm:$0xff] %v681
        %s938 = sand.u32 %s75, 1
        %s939 = scalar_lea.sflag [#allocation5], %s938
        %s940 = sand.u32 %s75, 1
        %s941 = smul.addr %s940, 2048
        %s942 = scalar_lea.vmem [#allocation6], %s941
        // Predicated region
        $region33: #{tpu_custom_call.1} parent=27 // pred_check
          %p943 = pneg %p85
        $region34: #{tpu_custom_call.1} parent=27 // pred_check_branch
          %945 = sbr.rel (%p943) target = $region36
        $region35: #{tpu_custom_call.1} parent=27 // pred_region
          %s946 = smul.u32 32, %s20
          %948 = vsyncadd %s939, 0
          %s949 = smul.addr %s946, 8
          %s950 = smul.addr %s949, 8
          %s951 = scalar_lea.hbm %s2, %s950
          %s952 = sshll.u32 %s942, 4
          %s953 = int_to_ptr.vmem [resolvable:$true] %s952
          %s954 = sshll.u32 %s951, 4
          %s955 = int_to_ptr.hbm [resolvable:$true] %s954
          %960 = dma.vmem_to_hbm [thread:$0]  %s953, 32768, %s955, %s939, 1024, 1024, 64
        $region36: #{tpu_custom_call.1} parent=27 // pred_fallthru
          _
      $region28: #{tpu_custom_call.1} parent=5 // pred_fallthru
        _
      %p961 = scmp.le.s32.totalorder 2, %s15
      // Predicated region
      $region37: #{tpu_custom_call.1} parent=5 // pred_check
        %p962 = pneg %p961
      $region38: #{tpu_custom_call.1} parent=5 // pred_check_branch
        %964 = sbr.rel (%p962) target = $region40
      $region39: #{tpu_custom_call.1} parent=5 // pred_region
        %s965 = ssub.s32 %s15, 2
        // Predicated region
        $region41: #{tpu_custom_call.1} parent=39 // pred_check
          %p966 = pneg %p91
        $region42: #{tpu_custom_call.1} parent=39 // pred_check_branch
          %968 = sbr.rel (%p966) target = $region44
        $region43: #{tpu_custom_call.1} parent=39 // pred_region
          %s969 = sand.u32 %s76, 1
          %s970 = scalar_lea.sflag [#allocation5], %s969
          %s971 = sand.u32 %s76, 1
          %s972 = smul.addr %s971, 2048
          %s973 = scalar_lea.vmem [#allocation6], %s972
          %975 = dma.done %s970, 32768
        $region44: #{tpu_custom_call.1} parent=39 // pred_fallthru
          _
      $region40: #{tpu_custom_call.1} parent=5 // pred_fallthru
        _
    $region6: #{tpu_custom_call.1} parent=1 // loop_footer
      %s19 = sadd.s32 1, %s15
    $region7: #{tpu_custom_call.1} parent=1 // loop_footer_branch
      %14 = sbr.rel target = $region3
    $region8: #{tpu_custom_call.1} parent=1 // loop_exit
      _
    %976 = vsyncpa [#allocation4], 1
    %s977 = scalar_lea.sflag [#allocation4], 1
    %978 = vsyncpa %s977, 1
    %979 = vsyncpa [#allocation5], 1
    %s980 = scalar_lea.sflag [#allocation5], 1
    %981 = vsyncpa %s980, 1

</llo_original>
